<compile_context>
chip_gen: v6e
topology: v6e:2x2x1
jax: 0.10.0
libtpu: 0.0.40
codegen_flags: <defaults>
</compile_context>

<pallas_src>
import functools
import math

import jax
import jax.numpy as jnp
from jax.experimental import pallas as pl
from jax.experimental.pallas import tpu as pltpu


_LANES = 512            # lane-dense last dim (multiple of 128)
_MAX_BLOCK_ROWS = 512   # 512 rows * 512 lanes * 4 B = 1 MiB per f32 block
_TARGET_GRID = 8        # >= 4 grid steps per TensorCore on v7x (pipeline ramp)


def _bootstrap_kernel(x_ref, o_ref, *, constant, prescale, postscale):
    # Compute in f32 in-vreg (safe on v5e's f32-only VPU; free on this
    # HBM-bound op — bf16 I/O already halves the bytes that matter).
    x = x_ref[...].astype(jnp.float32)
    c = jnp.float32(constant)
    # x += constant ; x *= prescale   (two multiplies kept separate to mirror
    # the two ciphertext multiplies of the original forward)
    y = (x + c) * jnp.float32(prescale)
    # bootstrap(): value-identity (no plaintext compute)
    # x *= postscale ; x -= constant
    y = y * jnp.float32(postscale) - c
    o_ref[...] = y.astype(o_ref.dtype)


def _choose_block_rows(rows, row_mult):
    """Fixed-size lane-dense blocks; cdiv grid handles the (masked) tail.

    rows and the returned block_rows are multiples of `row_mult` (dtype-aware
    sublane packing: 8 for f32, 16 for bf16, 32 for int8/fp8).
    """
    if rows <= _MAX_BLOCK_ROWS:
        # Small array: single block (== full array), latency-bound anyway.
        return rows
    # Large array: aim for >= _TARGET_GRID steps so both v7x TensorCores get
    # pipeline depth, but never exceed ~1 MiB (f32) per block.
    per_step = -(-rows // _TARGET_GRID)                 # cdiv(rows, 8)
    per_step = -(-per_step // row_mult) * row_mult      # round up to packing
    return max(row_mult, min(_MAX_BLOCK_ROWS, per_step))


def _bootstrap_forward(x, *, constant, prescale, postscale):
    orig_shape = x.shape
    orig_dtype = x.dtype
    elements = int(math.prod(orig_shape)) if orig_shape else 1

    # Dtype-aware row granularity: sub-32-bit dtypes pack 2/4 rows per sublane.
    itemsize = jnp.dtype(orig_dtype).itemsize
    row_mult = 8 * max(1, 4 // itemsize)
    chunk = _LANES * row_mult

    # Lane-dense 2D view of the flat activation, padded only up to a
    # (row_mult x 512) tile; the padded tail is sliced off below (it is never
    # consumed by callers of forward(), matching the zero-padded FHE slots).
    padded = -(-elements // chunk) * chunk
    x_flat = jnp.ravel(x)
    if padded != elements:
        x_flat = jnp.pad(x_flat, (0, padded - elements))
    rows = padded // _LANES
    x2d = x_flat.reshape(rows, _LANES)

    block_rows = _choose_block_rows(rows, row_mult)
    grid = (pl.cdiv(rows, block_rows),)

    kernel = functools.partial(
        _bootstrap_kernel,
        constant=constant,
        prescale=prescale,
        postscale=postscale,
    )

    out2d = pl.pallas_call(
        kernel,
        out_shape=jax.ShapeDtypeStruct((rows, _LANES), orig_dtype),
        grid=grid,
        in_specs=[pl.BlockSpec((block_rows, _LANES), lambda i: (i, 0))],
        out_specs=pl.BlockSpec((block_rows, _LANES), lambda i: (i, 0)),
        compiler_params=pltpu.CompilerParams(
            dimension_semantics=("parallel",)
        ),
    )(x2d)

    out_flat = out2d.reshape(-1)
    if padded != elements:
        out_flat = out_flat[:elements]
    return out_flat.reshape(orig_shape)


class Bootstrap:
    """JAX/Pallas reimplementation of orion.nn.operations.Bootstrap."""

    def __init__(self, input_min, input_max, input_level, margin=1.0):
        self.input_min = float(input_min)
        self.input_max = float(input_max)
        self.input_level = input_level
        self.margin = float(margin)
        self.prescale = 1.0
        self.postscale = 1.0
        self.constant = 0.0
        self.he_mode = True
        self._elements = None
        self._slots = None
        self._jitted = None

    # --- mirrors Module.fit() ---
    def fit(self):
        center = (self.input_min + self.input_max) / 2.0
        half_range = (self.input_max - self.input_min) / 2.0
        self.low = center - self.margin * half_range
        self.high = center + self.margin * half_range
        if self.high - self.low > 2:
            self.postscale = math.ceil((self.high - self.low) / 2.0)
            self.prescale = 1.0 / self.postscale
        self.constant = -(self.low + self.high) / 2.0
        self._jitted = None  # constants changed -> retrace

    # --- mirrors Module.compile() (prescale vector folded into a scalar;
    #     the zero-padded FHE slot tail is never consumed by forward()) ---
    def compile(self, fhe_input_shape):
        elements = int(math.prod(fhe_input_shape))
        self._elements = elements
        self._slots = 2 ** math.ceil(math.log2(max(elements, 1)))

    def forward(self, x):
        if not self.he_mode:
            return x

        assert self._elements is not None, "call compile() first"
        assert int(math.prod(x.shape)) == self._elements

        if self._jitted is None:
            self._jitted = jax.jit(
                functools.partial(
                    _bootstrap_forward,
                    constant=self.constant,
                    prescale=self.prescale,
                    postscale=self.postscale,
                )
            )
        return self._jitted(x)

    __call__ = forward


if __name__ == "__main__":
    # Small, module-consistent shapes: NCHW activations (B=2, C=4, H=W=16).
    key = jax.random.PRNGKey(0)
    x = jax.random.uniform(
        key, (2, 4, 16, 16), dtype=jnp.float32, minval=-1.0, maxval=5.0
    )

    # input_min / input_max chosen so both the constant-shift and the
    # prescale/postscale branches of fit() are exercised.
    bootstrap = Bootstrap(input_min=-1.0, input_max=5.0, input_level=2, margin=1.0)
    bootstrap.fit()            # -> prescale=1/3, postscale=3, constant=-2
    bootstrap.compile(x.shape)

    y = bootstrap(x)
    y = jax.block_until_ready(y)

    # Pure-JAX reference of the same forward semantics (padded FHE tail is
    # sliced off in the original wrapper, so it never affects the output).
    ref = ((x + bootstrap.constant) * bootstrap.prescale) * bootstrap.postscale \
        - bootstrap.constant

    assert y.shape == x.shape and y.dtype == x.dtype
    assert jnp.allclose(y, ref, atol=1e-5, rtol=1e-5)
    print("KERNEL_OK")
</pallas_src>

<mosaic_0001>
module attributes {stable_mosaic.version = 11 : i64} {
  func.func @_bootstrap_kernel(%arg0: i32, %arg1: memref<8x512xf32, #tpu.memory_space<vmem>>, %arg2: memref<8x512xf32, #tpu.memory_space<vmem>>) attributes {dimension_semantics = [#tpu.dimension_semantics<parallel>], iteration_bounds = array<i64: 1>, scalar_prefetch = 0 : i64, scratch_operands = 0 : i64, tpu.core_type = #tpu.core_type<tc>, window_params = [{transform_indices = @transform_0, window_bounds = array<i64: 8, 512>}, {transform_indices = @transform_1, window_bounds = array<i64: 8, 512>}]} {
    %c0 = arith.constant 0 : index
    %c0_0 = arith.constant 0 : index
    %0 = vector.load %arg1[%c0, %c0_0] : memref<8x512xf32, #tpu.memory_space<vmem>>, vector<8x512xf32>
    %cst = arith.constant -2.000000e+00 : f32
    %1 = vector.broadcast %cst : f32 to vector<8x512xf32>
    %2 = arith.addf %0, %1 : vector<8x512xf32>
    %cst_1 = arith.constant 0.333333343 : f32
    %3 = vector.broadcast %cst_1 : f32 to vector<8x512xf32>
    %4 = arith.mulf %2, %3 : vector<8x512xf32>
    %cst_2 = arith.constant 3.000000e+00 : f32
    %5 = vector.broadcast %cst_2 : f32 to vector<8x512xf32>
    %6 = arith.mulf %4, %5 : vector<8x512xf32>
    %cst_3 = arith.constant -2.000000e+00 : f32
    %7 = vector.broadcast %cst_3 : f32 to vector<8x512xf32>
    %8 = arith.subf %6, %7 : vector<8x512xf32>
    %c0_4 = arith.constant 0 : index
    %c0_5 = arith.constant 0 : index
    %9 = vector.load %arg2[%c0_4, %c0_5] : memref<8x512xf32, #tpu.memory_space<vmem>>, vector<8x512xf32>
    tpu.vector_store %arg2[%c0_4, %c0_5], %8 {strides = array<i32>} : memref<8x512xf32, #tpu.memory_space<vmem>>, vector<8x512xf32>,
    return
  }
  func.func @transform_0(%arg0: i32) -> (i32, i32) {
    %c0_i32 = arith.constant 0 : i32
    %c0_i32_0 = arith.constant 0 : i32
    return %arg0, %c0_i32 : i32, i32
  }
  func.func @transform_1(%arg0: i32) -> (i32, i32) {
    %c0_i32 = arith.constant 0 : i32
    %c0_i32_0 = arith.constant 0 : i32
    return %arg0, %c0_i32 : i32, i32
  }
}

</mosaic_0001>

<llo_original>
// kernel: _bootstrap_forward.1
$region0: #{_bootstrap_forward.1}
  #allocation0 [shape = 'u32[]', space=smem, size = 0x4, offset = 0x4, fixed_abs, tag = 'smem constant byte address 0x4 - core index']
  #allocation1 [shape = 'u32[144,128]{1,0:T(1,128)}', space=vmem, size = 0x12000, scoped, tag = 'internal scratch']
  %s0 = inlined_call_operand.vmem [shape: f32[8,512], index: 0, kind: input, shape index: {}]
  %s1 = inlined_call_operand.vmem [shape: f32[8,512], index: 1, kind: output, shape index: {}]
  %s2 = sld [smem:[#allocation0]]
  $region14: #{_bootstrap_forward.1} parent=0
    _
  %s4 = ssub.s32 1, %s2
  %s5 = scalar_select 0, %s4, %s2
  // Predicated region
  $region2: #{_bootstrap_forward.1} parent=0 // pred_check
    _
  $region3: #{_bootstrap_forward.1} parent=0 // pred_check_branch
    %7 = sbr.rel (0) target = $region5
  $region4: #{_bootstrap_forward.1} parent=0 // pred_region
    _
  $region5: #{_bootstrap_forward.1} parent=0 // pred_fallthru
    _
  %v8 = vld [vmem:[%s0] sm:$0xff]
  %v9 = vld [vmem:[%s0 + $0x8] sm:$0xff]
  %v10 = vld [vmem:[%s0 + $0x10] sm:$0xff]
  %v11 = vld [vmem:[%s0 + $0x18] sm:$0xff]
  %v12 = vadd.f32 %v8, -2.0
  %v13 = vadd.f32 %v9, -2.0
  %v14 = vadd.f32 %v10, -2.0
  %v15 = vadd.f32 %v11, -2.0
  %v16 = vmul.f32 %v12, 0.33333334
  %v17 = vmul.f32 %v13, 0.33333334
  %v18 = vmul.f32 %v14, 0.33333334
  %v19 = vmul.f32 %v15, 0.33333334
  %v20 = vmul.f32 %v16, 3.0
  %v21 = vmul.f32 %v17, 3.0
  %v22 = vmul.f32 %v18, 3.0
  %v23 = vmul.f32 %v19, 3.0
  %v24 = vsub.f32 %v20, -2.0
  %v25 = vsub.f32 %v21, -2.0
  %v26 = vsub.f32 %v22, -2.0
  %v27 = vsub.f32 %v23, -2.0
  %28 = vst [vmem:[%s1] sm:$0xff] %v24
  %29 = vst [vmem:[%s1 + $0x8] sm:$0xff] %v25
  %30 = vst [vmem:[%s1 + $0x10] sm:$0xff] %v26
  %31 = vst [vmem:[%s1 + $0x18] sm:$0xff] %v27
  // Predicated region
  $region6: #{_bootstrap_forward.1} parent=0 // pred_check
    _
  $region7: #{_bootstrap_forward.1} parent=0 // pred_check_branch
    %33 = sbr.rel (0) target = $region9
  $region8: #{_bootstrap_forward.1} parent=0 // pred_region
    _
  $region9: #{_bootstrap_forward.1} parent=0 // pred_fallthru
    _
  // Predicated region
  $region10: #{_bootstrap_forward.1} parent=0 // pred_check
    _
  $region11: #{_bootstrap_forward.1} parent=0 // pred_check_branch
    %35 = sbr.rel (0) target = $region13
  $region12: #{_bootstrap_forward.1} parent=0 // pred_region
    _
  $region13: #{_bootstrap_forward.1} parent=0 // pred_fallthru
    _

</llo_original>
